<compile_context>
chip_gen: v7x
topology: tpu7x:2x2x1
jax: 0.10.0
libtpu: 0.0.40
codegen_flags: <defaults>
</compile_context>

<pallas_src>
import functools

import jax
import jax.numpy as jnp
import numpy as np
from jax.experimental import pallas as pl
from jax.experimental.pallas import tpu as pltpu

LANES = 128


# ----------------------------------------------------------------------------
# Pallas kernel: one grid step processes a (26, block_rows, 128) channel-major
# block of cells; acc_ref is a persistent (block_rows, 128) per-cell loss
# accumulator; out_ref is a (1, 1) SMEM scalar written on the last step.
# ----------------------------------------------------------------------------
def _yolo_loss_kernel(n_ref, pred_ref, targ_ref, out_ref, acc_ref, *,
                      l_coord, l_noobj):
    step = pl.program_id(0)
    last = pl.num_programs(0) - 1

    @pl.when(step == 0)
    def _init():
        acc_ref[...] = jnp.zeros_like(acc_ref)

    f32 = jnp.float32

    def pch(c):                      # predicted channel c -> dense (rows, 128)
        return pred_ref[c].astype(f32)

    def tch(c):                      # target channel c -> dense (rows, 128)
        return targ_ref[c].astype(f32)

    # ---- masks from target confidence of box 0 ------------------------------
    t4 = tch(4)
    coo = t4 > 0.0                            # cells containing an object
    coo_f = coo.astype(f32)
    noo_f = (t4 == 0.0).astype(f32)           # empty cells (padded cells too)

    # ---- no-object confidence loss (channels 4 and 9) -----------------------
    p4 = pch(4)
    p9 = pch(9)
    t9 = tch(9)
    d4 = p4 - t4
    d9 = p9 - t9
    noobj = noo_f * (d4 * d4 + d9 * d9)

    # ---- class loss (channels 10..25) ---------------------------------------
    cls = jnp.zeros_like(t4)
    for c in range(10, 26):
        dc = pch(c) - tch(c)
        cls = cls + dc * dc
    cls = coo_f * cls

    # ---- per-cell box handling ----------------------------------------------
    cell = 448.0 / 7.0
    px0, py0, pw0, ph0 = pch(0), pch(1), pch(2), pch(3)
    px1, py1, pw1, ph1 = pch(5), pch(6), pch(7), pch(8)
    tx0, ty0, tw0, th0 = tch(0), tch(1), tch(2), tch(3)
    tx1, ty1, tw1, th1 = tch(5), tch(6), tch(7), tch(8)

    # target box 0 corners (both predicted boxes are matched against it)
    thx = 0.5 * tw0 * 448.0
    thy = 0.5 * th0 * 448.0
    gx1 = tx0 * cell - thx
    gx2 = tx0 * cell + thx
    gy1 = ty0 * cell - thy
    gy2 = ty0 * cell + thy
    area_t = (gx2 - gx1) * (gy2 - gy1)

    def iou_vs_target(cx, cy, w, h):
        hx = 0.5 * w * 448.0
        hy = 0.5 * h * 448.0
        bx1 = cx * cell - hx
        bx2 = cx * cell + hx
        by1 = cy * cell - hy
        by2 = cy * cell + hy
        area_b = (bx2 - bx1) * (by2 - by1)
        left = jnp.maximum(bx1, gx1)
        right = jnp.minimum(bx2, gx2)
        top = jnp.maximum(by1, gy1)
        bottom = jnp.minimum(by2, gy2)
        inter = (right - left) * (bottom - top)
        denom = area_b + area_t - inter
        # guard degenerate zero-area boxes / zero-padded cells (benign
        # deviation from the reference, which would divide by zero there)
        denom = jnp.where(denom == 0.0, 1.0, denom)
        no_inter = jnp.logical_or(left >= right, top >= bottom)
        return jnp.where(no_inter, 0.0, inter / denom)

    iou_a = iou_vs_target(px0, py0, pw0, ph0)     # pred box 0 vs target box 0
    iou_b = iou_vs_target(px1, py1, pw1, ph1)     # pred box 1 vs target box 0

    resp0 = iou_a > iou_b                         # pred box 0 is responsible
    max_iou = jnp.where(resp0, iou_a, iou_b)

    # responsible / non-responsible channel selection (per-channel selects,
    # no full 5-channel tensors materialized)
    prx = jnp.where(resp0, px0, px1)
    pry = jnp.where(resp0, py0, py1)
    prw = jnp.where(resp0, pw0, pw1)
    prh = jnp.where(resp0, ph0, ph1)
    prc = jnp.where(resp0, p4, p9)
    pnc = jnp.where(resp0, p9, p4)
    trx = jnp.where(resp0, tx0, tx1)
    trY = jnp.where(resp0, ty0, ty1)
    trw = jnp.where(resp0, tw0, tw1)
    trh = jnp.where(resp0, th0, th1)

    contain = (prc - max_iou) ** 2
    not_contain = pnc * pnc

    # sqrt is guarded only on non-object cells (their contribution is masked
    # out); NaN for negative predicted w/h on object cells matches PyTorch.
    prw_s = jnp.sqrt(jnp.where(coo, prw, 1.0))
    prh_s = jnp.sqrt(jnp.where(coo, prh, 1.0))
    trw_s = jnp.sqrt(jnp.where(coo, trw, 1.0))
    trh_s = jnp.sqrt(jnp.where(coo, trh, 1.0))

    dx = prx - trx
    dy = pry - trY
    dw = prw_s - trw_s
    dh = prh_s - trh_s
    loc = dx * dx + dy * dy + dw * dw + dh * dh

    # ---- fused per-cell weighted loss (pure VPU, no per-term reductions) ----
    per_cell = (l_noobj * noobj + cls
                + coo_f * (contain + 0.5 * not_contain + l_coord * loc))

    acc_ref[...] += per_cell

    # ---- finalize: single cross-lane reduction, scalar store to SMEM --------
    @pl.when(step == last)
    def _finish():
        inv_n = 1.0 / n_ref[0].astype(f32)
        out_ref[0, 0] = jnp.sum(acc_ref[...]) * inv_n


# ----------------------------------------------------------------------------
# Wrapper: layout plumbing (channels-first, lane-dense, padded), grid setup.
# ----------------------------------------------------------------------------
def yolo_loss_pallas(pred, target, *, S, B, l_coord, l_noobj, block_rows=32):
    assert B == 2, "this loss implementation assumes B == 2 boxes per cell"
    N = pred.shape[0]
    C = pred.shape[-1]                       # 26 = 2*5 + 16 classes
    R = N * S * S

    # block size: multiple of 8 sublane rows, no larger than the data needs.
    rows_needed = -(-R // LANES)
    rows_needed = ((rows_needed + 7) // 8) * 8
    block_rows = max(8, (min(int(block_rows), rows_needed) // 8) * 8)
    cells_per_block = block_rows * LANES
    n_blocks = -(-R // cells_per_block)
    R_pad = n_blocks * cells_per_block

    # channels-first lane-dense layout: (C, R_pad//128, 128).  Padded cells are
    # all-zero => target conf == 0 => they contribute exactly 0 to every term.
    def to_blocks(x):
        x = jnp.transpose(x.reshape(R, C))                   # (C, R)
        if R_pad != R:
            x = jnp.pad(x, ((0, 0), (0, R_pad - R)))
        return x.reshape(C, R_pad // LANES, LANES)

    p3 = to_blocks(pred)      # original dtype (bf16 inputs halve DMA bytes)
    t3 = to_blocks(target)

    n_arr = jnp.array([N], jnp.int32)        # SMEM scalar, not a baked const

    kernel = functools.partial(_yolo_loss_kernel,
                               l_coord=float(l_coord),
                               l_noobj=float(l_noobj))

    grid_spec = pltpu.PrefetchScalarGridSpec(
        num_scalar_prefetch=1,
        grid=(n_blocks,),
        in_specs=[
            pl.BlockSpec((C, block_rows, LANES), lambda i, n: (0, i, 0)),
            pl.BlockSpec((C, block_rows, LANES), lambda i, n: (0, i, 0)),
        ],
        out_specs=pl.BlockSpec(memory_space=pltpu.MemorySpace.SMEM),
        scratch_shapes=[pltpu.VMEM((block_rows, LANES), jnp.float32)],
    )

    out = pl.pallas_call(
        kernel,
        out_shape=jax.ShapeDtypeStruct((1, 1), jnp.float32),
        grid_spec=grid_spec,
        # row axis carries the accumulator -> "arbitrary"
        compiler_params=pltpu.CompilerParams(
            dimension_semantics=("arbitrary",)),
    )(n_arr, p3, t3)
    return out[0, 0]


# ----------------------------------------------------------------------------
# Pure-numpy reference (direct port of the PyTorch forward) for verification
# ----------------------------------------------------------------------------
def yolo_loss_ref(pred, target, *, S, B, l_coord, l_noobj):
    pred = np.asarray(pred, np.float32)
    target = np.asarray(target, np.float32)
    N = pred.shape[0]
    P = pred.reshape(-1, 26)
    T = target.reshape(-1, 26)
    coo = T[:, 4] > 0
    noo = T[:, 4] == 0

    coo_pred, coo_target = P[coo], T[coo]
    box_pred = coo_pred[:, :10].reshape(-1, 5)
    class_pred = coo_pred[:, 10:]
    box_target = coo_target[:, :10].reshape(-1, 5)
    class_target = coo_target[:, 10:]

    noo_pred, noo_target = P[noo], T[noo]
    nooobj_loss = float(np.sum((noo_pred[:, [4, 9]] - noo_target[:, [4, 9]]) ** 2))

    cell = 448.0 / 7.0

    def xyxy(b):
        o = np.zeros((b.shape[0], 4), np.float32)
        o[:, :2] = b[:, :2] * cell - 0.5 * b[:, 2:4] * 448.0
        o[:, 2:4] = b[:, :2] * cell + 0.5 * b[:, 2:4] * 448.0
        return o

    def iou(b1, b2):
        a1 = (b1[2] - b1[0]) * (b1[3] - b1[1])
        a2 = (b2[2] - b2[0]) * (b2[3] - b2[1])
        l, r = max(b1[0], b2[0]), min(b1[2], b2[2])
        t_, b_ = max(b1[1], b2[1]), min(b1[3], b2[3])
        if l >= r or t_ >= b_:
            return 0.0
        inter = (r - l) * (b_ - t_)
        return inter / (a1 + a2 - inter)

    loc = contain = notcontain = 0.0
    for i in range(0, box_target.shape[0], 2):
        b1 = xyxy(box_pred[i:i + 2])
        b2 = xyxy(box_target[i:i + 1])
        iou1, iou2 = iou(b1[0], b2[0]), iou(b1[1], b2[0])
        if iou1 > iou2:
            max_iou, max_index = iou1, 0
        else:
            max_iou, max_index = iou2, 1
        pr = box_pred[i + max_index]
        tr = box_target[i + max_index]
        pnr = box_pred[i + 1 - max_index]
        contain += (pr[4] - max_iou) ** 2
        loc += float(np.sum((pr[:2] - tr[:2]) ** 2)
                     + np.sum((np.sqrt(pr[2:4]) - np.sqrt(tr[2:4])) ** 2))
        notcontain += pnr[4] ** 2

    class_loss = float(np.sum((class_pred - class_target) ** 2))
    total = (l_coord * loc + contain + 0.5 * notcontain
             + l_noobj * nooobj_loss + class_loss)
    return total / N


if __name__ == "__main__":
    # module hyperparameters (deterministic, in-script)
    S, B = 7, 2
    l_coord, l_noobj = 5.0, 0.5
    N = 2  # batch

    key = jax.random.PRNGKey(0)
    k1, k2, k3 = jax.random.split(key, 3)
    # predictions / targets in (0.05, 0.95) so widths/heights are positive
    pred = jax.random.uniform(k1, (N, S, S, 26), jnp.float32, 0.05, 0.95)
    target = jax.random.uniform(k2, (N, S, S, 26), jnp.float32, 0.05, 0.95)
    # object indicator: confidence channels 4 and 9 are exactly 0 or 1
    obj = (jax.random.uniform(k3, (N, S, S)) > 0.6).astype(jnp.float32)
    target = target.at[..., 4].set(obj)
    target = target.at[..., 9].set(obj)

    loss = yolo_loss_pallas(pred, target, S=S, B=B,
                            l_coord=l_coord, l_noobj=l_noobj)
    loss = jax.block_until_ready(loss)

    ref = yolo_loss_ref(pred, target, S=S, B=B,
                        l_coord=l_coord, l_noobj=l_noobj)
    np.testing.assert_allclose(float(loss), ref, rtol=1e-4, atol=1e-4)

    print("KERNEL_OK")
</pallas_src>

<mosaic_0001>
module attributes {stable_mosaic.version = 11 : i64} {
  func.func @_yolo_loss_kernel(%arg0: i32, %arg1: memref<1xi32, #tpu.memory_space<smem>>, %arg2: memref<26x8x128xf32, #tpu.memory_space<vmem>>, %arg3: memref<26x8x128xf32, #tpu.memory_space<vmem>>, %arg4: memref<1x1xf32, #tpu.memory_space<smem>>, %arg5: memref<8x128xf32, #tpu.memory_space<vmem>>) attributes {dimension_semantics = [#tpu.dimension_semantics<arbitrary>], iteration_bounds = array<i64: 1>, scalar_prefetch = 1 : i64, scratch_operands = 1 : i64, tpu.core_type = #tpu.core_type<tc>, window_params = [{transform_indices = @transform_0, window_bounds = array<i64: 26, 8, 128>}, {transform_indices = @transform_1, window_bounds = array<i64: 26, 8, 128>}, {transform_indices = @transform_2, window_bounds = array<i64: 1, 1>}]} {
    %c0_i32 = arith.constant 0 : i32
    %0 = arith.cmpi eq, %arg0, %c0_i32 : i32
    %1 = arith.extui %0 : i1 to i32
    %c0_i32_0 = arith.constant 0 : i32
    %2 = arith.cmpi ne, %1, %c0_i32_0 : i32
    scf.if %2 {
      %cst_176 = arith.constant 0.000000e+00 : f32
      %333 = vector.broadcast %cst_176 : f32 to vector<8x128xf32>
      %c0_177 = arith.constant 0 : index
      %c0_178 = arith.constant 0 : index
      %334 = vector.load %arg5[%c0_177, %c0_178] : memref<8x128xf32, #tpu.memory_space<vmem>>, vector<8x128xf32>
      tpu.vector_store %arg5[%c0_177, %c0_178], %333 {strides = array<i32>} : memref<8x128xf32, #tpu.memory_space<vmem>>, vector<8x128xf32>,
    } else {
    }
    %c4 = arith.constant 4 : index
    %c0 = arith.constant 0 : index
    %c0_1 = arith.constant 0 : index
    %3 = vector.load %arg3[%c4, %c0, %c0_1] : memref<26x8x128xf32, #tpu.memory_space<vmem>>, vector<1x8x128xf32>
    %4 = vector.shape_cast %3 : vector<1x8x128xf32> to vector<8x128xf32>
    %cst = arith.constant 0.000000e+00 : f32
    %5 = vector.broadcast %cst : f32 to vector<8x128xf32>
    %6 = arith.cmpf ogt, %4, %5 : vector<8x128xf32>
    %7 = arith.extui %6 : vector<8x128xi1> to vector<8x128xi32>
    %8 = arith.sitofp %7 : vector<8x128xi32> to vector<8x128xf32>
    %cst_2 = arith.constant 0.000000e+00 : f32
    %9 = vector.broadcast %cst_2 : f32 to vector<8x128xf32>
    %10 = arith.cmpf oeq, %4, %9 : vector<8x128xf32>
    %11 = arith.extui %10 : vector<8x128xi1> to vector<8x128xi32>
    %12 = arith.sitofp %11 : vector<8x128xi32> to vector<8x128xf32>
    %c4_3 = arith.constant 4 : index
    %c0_4 = arith.constant 0 : index
    %c0_5 = arith.constant 0 : index
    %13 = vector.load %arg2[%c4_3, %c0_4, %c0_5] : memref<26x8x128xf32, #tpu.memory_space<vmem>>, vector<1x8x128xf32>
    %14 = vector.shape_cast %13 : vector<1x8x128xf32> to vector<8x128xf32>
    %c9 = arith.constant 9 : index
    %c0_6 = arith.constant 0 : index
    %c0_7 = arith.constant 0 : index
    %15 = vector.load %arg2[%c9, %c0_6, %c0_7] : memref<26x8x128xf32, #tpu.memory_space<vmem>>, vector<1x8x128xf32>
    %16 = vector.shape_cast %15 : vector<1x8x128xf32> to vector<8x128xf32>
    %c9_8 = arith.constant 9 : index
    %c0_9 = arith.constant 0 : index
    %c0_10 = arith.constant 0 : index
    %17 = vector.load %arg3[%c9_8, %c0_9, %c0_10] : memref<26x8x128xf32, #tpu.memory_space<vmem>>, vector<1x8x128xf32>
    %18 = vector.shape_cast %17 : vector<1x8x128xf32> to vector<8x128xf32>
    %19 = arith.subf %14, %4 : vector<8x128xf32>
    %20 = arith.subf %16, %18 : vector<8x128xf32>
    %21 = arith.mulf %19, %19 : vector<8x128xf32>
    %22 = arith.mulf %20, %20 : vector<8x128xf32>
    %23 = arith.addf %21, %22 : vector<8x128xf32>
    %24 = arith.mulf %12, %23 : vector<8x128xf32>
    %cst_11 = arith.constant 0.000000e+00 : f32
    %25 = vector.broadcast %cst_11 : f32 to vector<8x128xf32>
    %c10 = arith.constant 10 : index
    %c0_12 = arith.constant 0 : index
    %c0_13 = arith.constant 0 : index
    %26 = vector.load %arg2[%c10, %c0_12, %c0_13] : memref<26x8x128xf32, #tpu.memory_space<vmem>>, vector<1x8x128xf32>
    %27 = vector.shape_cast %26 : vector<1x8x128xf32> to vector<8x128xf32>
    %c10_14 = arith.constant 10 : index
    %c0_15 = arith.constant 0 : index
    %c0_16 = arith.constant 0 : index
    %28 = vector.load %arg3[%c10_14, %c0_15, %c0_16] : memref<26x8x128xf32, #tpu.memory_space<vmem>>, vector<1x8x128xf32>
    %29 = vector.shape_cast %28 : vector<1x8x128xf32> to vector<8x128xf32>
    %30 = arith.subf %27, %29 : vector<8x128xf32>
    %31 = arith.mulf %30, %30 : vector<8x128xf32>
    %32 = arith.addf %25, %31 : vector<8x128xf32>
    %c11 = arith.constant 11 : index
    %c0_17 = arith.constant 0 : index
    %c0_18 = arith.constant 0 : index
    %33 = vector.load %arg2[%c11, %c0_17, %c0_18] : memref<26x8x128xf32, #tpu.memory_space<vmem>>, vector<1x8x128xf32>
    %34 = vector.shape_cast %33 : vector<1x8x128xf32> to vector<8x128xf32>
    %c11_19 = arith.constant 11 : index
    %c0_20 = arith.constant 0 : index
    %c0_21 = arith.constant 0 : index
    %35 = vector.load %arg3[%c11_19, %c0_20, %c0_21] : memref<26x8x128xf32, #tpu.memory_space<vmem>>, vector<1x8x128xf32>
    %36 = vector.shape_cast %35 : vector<1x8x128xf32> to vector<8x128xf32>
    %37 = arith.subf %34, %36 : vector<8x128xf32>
    %38 = arith.mulf %37, %37 : vector<8x128xf32>
    %39 = arith.addf %32, %38 : vector<8x128xf32>
    %c12 = arith.constant 12 : index
    %c0_22 = arith.constant 0 : index
    %c0_23 = arith.constant 0 : index
    %40 = vector.load %arg2[%c12, %c0_22, %c0_23] : memref<26x8x128xf32, #tpu.memory_space<vmem>>, vector<1x8x128xf32>
    %41 = vector.shape_cast %40 : vector<1x8x128xf32> to vector<8x128xf32>
    %c12_24 = arith.constant 12 : index
    %c0_25 = arith.constant 0 : index
    %c0_26 = arith.constant 0 : index
    %42 = vector.load %arg3[%c12_24, %c0_25, %c0_26] : memref<26x8x128xf32, #tpu.memory_space<vmem>>, vector<1x8x128xf32>
    %43 = vector.shape_cast %42 : vector<1x8x128xf32> to vector<8x128xf32>
    %44 = arith.subf %41, %43 : vector<8x128xf32>
    %45 = arith.mulf %44, %44 : vector<8x128xf32>
    %46 = arith.addf %39, %45 : vector<8x128xf32>
    %c13 = arith.constant 13 : index
    %c0_27 = arith.constant 0 : index
    %c0_28 = arith.constant 0 : index
    %47 = vector.load %arg2[%c13, %c0_27, %c0_28] : memref<26x8x128xf32, #tpu.memory_space<vmem>>, vector<1x8x128xf32>
    %48 = vector.shape_cast %47 : vector<1x8x128xf32> to vector<8x128xf32>
    %c13_29 = arith.constant 13 : index
    %c0_30 = arith.constant 0 : index
    %c0_31 = arith.constant 0 : index
    %49 = vector.load %arg3[%c13_29, %c0_30, %c0_31] : memref<26x8x128xf32, #tpu.memory_space<vmem>>, vector<1x8x128xf32>
    %50 = vector.shape_cast %49 : vector<1x8x128xf32> to vector<8x128xf32>
    %51 = arith.subf %48, %50 : vector<8x128xf32>
    %52 = arith.mulf %51, %51 : vector<8x128xf32>
    %53 = arith.addf %46, %52 : vector<8x128xf32>
    %c14 = arith.constant 14 : index
    %c0_32 = arith.constant 0 : index
    %c0_33 = arith.constant 0 : index
    %54 = vector.load %arg2[%c14, %c0_32, %c0_33] : memref<26x8x128xf32, #tpu.memory_space<vmem>>, vector<1x8x128xf32>
    %55 = vector.shape_cast %54 : vector<1x8x128xf32> to vector<8x128xf32>
    %c14_34 = arith.constant 14 : index
    %c0_35 = arith.constant 0 : index
    %c0_36 = arith.constant 0 : index
    %56 = vector.load %arg3[%c14_34, %c0_35, %c0_36] : memref<26x8x128xf32, #tpu.memory_space<vmem>>, vector<1x8x128xf32>
    %57 = vector.shape_cast %56 : vector<1x8x128xf32> to vector<8x128xf32>
    %58 = arith.subf %55, %57 : vector<8x128xf32>
    %59 = arith.mulf %58, %58 : vector<8x128xf32>
    %60 = arith.addf %53, %59 : vector<8x128xf32>
    %c15 = arith.constant 15 : index
    %c0_37 = arith.constant 0 : index
    %c0_38 = arith.constant 0 : index
    %61 = vector.load %arg2[%c15, %c0_37, %c0_38] : memref<26x8x128xf32, #tpu.memory_space<vmem>>, vector<1x8x128xf32>
    %62 = vector.shape_cast %61 : vector<1x8x128xf32> to vector<8x128xf32>
    %c15_39 = arith.constant 15 : index
    %c0_40 = arith.constant 0 : index
    %c0_41 = arith.constant 0 : index
    %63 = vector.load %arg3[%c15_39, %c0_40, %c0_41] : memref<26x8x128xf32, #tpu.memory_space<vmem>>, vector<1x8x128xf32>
    %64 = vector.shape_cast %63 : vector<1x8x128xf32> to vector<8x128xf32>
    %65 = arith.subf %62, %64 : vector<8x128xf32>
    %66 = arith.mulf %65, %65 : vector<8x128xf32>
    %67 = arith.addf %60, %66 : vector<8x128xf32>
    %c16 = arith.constant 16 : index
    %c0_42 = arith.constant 0 : index
    %c0_43 = arith.constant 0 : index
    %68 = vector.load %arg2[%c16, %c0_42, %c0_43] : memref<26x8x128xf32, #tpu.memory_space<vmem>>, vector<1x8x128xf32>
    %69 = vector.shape_cast %68 : vector<1x8x128xf32> to vector<8x128xf32>
    %c16_44 = arith.constant 16 : index
    %c0_45 = arith.constant 0 : index
    %c0_46 = arith.constant 0 : index
    %70 = vector.load %arg3[%c16_44, %c0_45, %c0_46] : memref<26x8x128xf32, #tpu.memory_space<vmem>>, vector<1x8x128xf32>
    %71 = vector.shape_cast %70 : vector<1x8x128xf32> to vector<8x128xf32>
    %72 = arith.subf %69, %71 : vector<8x128xf32>
    %73 = arith.mulf %72, %72 : vector<8x128xf32>
    %74 = arith.addf %67, %73 : vector<8x128xf32>
    %c17 = arith.constant 17 : index
    %c0_47 = arith.constant 0 : index
    %c0_48 = arith.constant 0 : index
    %75 = vector.load %arg2[%c17, %c0_47, %c0_48] : memref<26x8x128xf32, #tpu.memory_space<vmem>>, vector<1x8x128xf32>
    %76 = vector.shape_cast %75 : vector<1x8x128xf32> to vector<8x128xf32>
    %c17_49 = arith.constant 17 : index
    %c0_50 = arith.constant 0 : index
    %c0_51 = arith.constant 0 : index
    %77 = vector.load %arg3[%c17_49, %c0_50, %c0_51] : memref<26x8x128xf32, #tpu.memory_space<vmem>>, vector<1x8x128xf32>
    %78 = vector.shape_cast %77 : vector<1x8x128xf32> to vector<8x128xf32>
    %79 = arith.subf %76, %78 : vector<8x128xf32>
    %80 = arith.mulf %79, %79 : vector<8x128xf32>
    %81 = arith.addf %74, %80 : vector<8x128xf32>
    %c18 = arith.constant 18 : index
    %c0_52 = arith.constant 0 : index
    %c0_53 = arith.constant 0 : index
    %82 = vector.load %arg2[%c18, %c0_52, %c0_53] : memref<26x8x128xf32, #tpu.memory_space<vmem>>, vector<1x8x128xf32>
    %83 = vector.shape_cast %82 : vector<1x8x128xf32> to vector<8x128xf32>
    %c18_54 = arith.constant 18 : index
    %c0_55 = arith.constant 0 : index
    %c0_56 = arith.constant 0 : index
    %84 = vector.load %arg3[%c18_54, %c0_55, %c0_56] : memref<26x8x128xf32, #tpu.memory_space<vmem>>, vector<1x8x128xf32>
    %85 = vector.shape_cast %84 : vector<1x8x128xf32> to vector<8x128xf32>
    %86 = arith.subf %83, %85 : vector<8x128xf32>
    %87 = arith.mulf %86, %86 : vector<8x128xf32>
    %88 = arith.addf %81, %87 : vector<8x128xf32>
    %c19 = arith.constant 19 : index
    %c0_57 = arith.constant 0 : index
    %c0_58 = arith.constant 0 : index
    %89 = vector.load %arg2[%c19, %c0_57, %c0_58] : memref<26x8x128xf32, #tpu.memory_space<vmem>>, vector<1x8x128xf32>
    %90 = vector.shape_cast %89 : vector<1x8x128xf32> to vector<8x128xf32>
    %c19_59 = arith.constant 19 : index
    %c0_60 = arith.constant 0 : index
    %c0_61 = arith.constant 0 : index
    %91 = vector.load %arg3[%c19_59, %c0_60, %c0_61] : memref<26x8x128xf32, #tpu.memory_space<vmem>>, vector<1x8x128xf32>
    %92 = vector.shape_cast %91 : vector<1x8x128xf32> to vector<8x128xf32>
    %93 = arith.subf %90, %92 : vector<8x128xf32>
    %94 = arith.mulf %93, %93 : vector<8x128xf32>
    %95 = arith.addf %88, %94 : vector<8x128xf32>
    %c20 = arith.constant 20 : index
    %c0_62 = arith.constant 0 : index
    %c0_63 = arith.constant 0 : index
    %96 = vector.load %arg2[%c20, %c0_62, %c0_63] : memref<26x8x128xf32, #tpu.memory_space<vmem>>, vector<1x8x128xf32>
    %97 = vector.shape_cast %96 : vector<1x8x128xf32> to vector<8x128xf32>
    %c20_64 = arith.constant 20 : index
    %c0_65 = arith.constant 0 : index
    %c0_66 = arith.constant 0 : index
    %98 = vector.load %arg3[%c20_64, %c0_65, %c0_66] : memref<26x8x128xf32, #tpu.memory_space<vmem>>, vector<1x8x128xf32>
    %99 = vector.shape_cast %98 : vector<1x8x128xf32> to vector<8x128xf32>
    %100 = arith.subf %97, %99 : vector<8x128xf32>
    %101 = arith.mulf %100, %100 : vector<8x128xf32>
    %102 = arith.addf %95, %101 : vector<8x128xf32>
    %c21 = arith.constant 21 : index
    %c0_67 = arith.constant 0 : index
    %c0_68 = arith.constant 0 : index
    %103 = vector.load %arg2[%c21, %c0_67, %c0_68] : memref<26x8x128xf32, #tpu.memory_space<vmem>>, vector<1x8x128xf32>
    %104 = vector.shape_cast %103 : vector<1x8x128xf32> to vector<8x128xf32>
    %c21_69 = arith.constant 21 : index
    %c0_70 = arith.constant 0 : index
    %c0_71 = arith.constant 0 : index
    %105 = vector.load %arg3[%c21_69, %c0_70, %c0_71] : memref<26x8x128xf32, #tpu.memory_space<vmem>>, vector<1x8x128xf32>
    %106 = vector.shape_cast %105 : vector<1x8x128xf32> to vector<8x128xf32>
    %107 = arith.subf %104, %106 : vector<8x128xf32>
    %108 = arith.mulf %107, %107 : vector<8x128xf32>
    %109 = arith.addf %102, %108 : vector<8x128xf32>
    %c22 = arith.constant 22 : index
    %c0_72 = arith.constant 0 : index
    %c0_73 = arith.constant 0 : index
    %110 = vector.load %arg2[%c22, %c0_72, %c0_73] : memref<26x8x128xf32, #tpu.memory_space<vmem>>, vector<1x8x128xf32>
    %111 = vector.shape_cast %110 : vector<1x8x128xf32> to vector<8x128xf32>
    %c22_74 = arith.constant 22 : index
    %c0_75 = arith.constant 0 : index
    %c0_76 = arith.constant 0 : index
    %112 = vector.load %arg3[%c22_74, %c0_75, %c0_76] : memref<26x8x128xf32, #tpu.memory_space<vmem>>, vector<1x8x128xf32>
    %113 = vector.shape_cast %112 : vector<1x8x128xf32> to vector<8x128xf32>
    %114 = arith.subf %111, %113 : vector<8x128xf32>
    %115 = arith.mulf %114, %114 : vector<8x128xf32>
    %116 = arith.addf %109, %115 : vector<8x128xf32>
    %c23 = arith.constant 23 : index
    %c0_77 = arith.constant 0 : index
    %c0_78 = arith.constant 0 : index
    %117 = vector.load %arg2[%c23, %c0_77, %c0_78] : memref<26x8x128xf32, #tpu.memory_space<vmem>>, vector<1x8x128xf32>
    %118 = vector.shape_cast %117 : vector<1x8x128xf32> to vector<8x128xf32>
    %c23_79 = arith.constant 23 : index
    %c0_80 = arith.constant 0 : index
    %c0_81 = arith.constant 0 : index
    %119 = vector.load %arg3[%c23_79, %c0_80, %c0_81] : memref<26x8x128xf32, #tpu.memory_space<vmem>>, vector<1x8x128xf32>
    %120 = vector.shape_cast %119 : vector<1x8x128xf32> to vector<8x128xf32>
    %121 = arith.subf %118, %120 : vector<8x128xf32>
    %122 = arith.mulf %121, %121 : vector<8x128xf32>
    %123 = arith.addf %116, %122 : vector<8x128xf32>
    %c24 = arith.constant 24 : index
    %c0_82 = arith.constant 0 : index
    %c0_83 = arith.constant 0 : index
    %124 = vector.load %arg2[%c24, %c0_82, %c0_83] : memref<26x8x128xf32, #tpu.memory_space<vmem>>, vector<1x8x128xf32>
    %125 = vector.shape_cast %124 : vector<1x8x128xf32> to vector<8x128xf32>
    %c24_84 = arith.constant 24 : index
    %c0_85 = arith.constant 0 : index
    %c0_86 = arith.constant 0 : index
    %126 = vector.load %arg3[%c24_84, %c0_85, %c0_86] : memref<26x8x128xf32, #tpu.memory_space<vmem>>, vector<1x8x128xf32>
    %127 = vector.shape_cast %126 : vector<1x8x128xf32> to vector<8x128xf32>
    %128 = arith.subf %125, %127 : vector<8x128xf32>
    %129 = arith.mulf %128, %128 : vector<8x128xf32>
    %130 = arith.addf %123, %129 : vector<8x128xf32>
    %c25 = arith.constant 25 : index
    %c0_87 = arith.constant 0 : index
    %c0_88 = arith.constant 0 : index
    %131 = vector.load %arg2[%c25, %c0_87, %c0_88] : memref<26x8x128xf32, #tpu.memory_space<vmem>>, vector<1x8x128xf32>
    %132 = vector.shape_cast %131 : vector<1x8x128xf32> to vector<8x128xf32>
    %c25_89 = arith.constant 25 : index
    %c0_90 = arith.constant 0 : index
    %c0_91 = arith.constant 0 : index
    %133 = vector.load %arg3[%c25_89, %c0_90, %c0_91] : memref<26x8x128xf32, #tpu.memory_space<vmem>>, vector<1x8x128xf32>
    %134 = vector.shape_cast %133 : vector<1x8x128xf32> to vector<8x128xf32>
    %135 = arith.subf %132, %134 : vector<8x128xf32>
    %136 = arith.mulf %135, %135 : vector<8x128xf32>
    %137 = arith.addf %130, %136 : vector<8x128xf32>
    %138 = arith.mulf %8, %137 : vector<8x128xf32>
    %c0_92 = arith.constant 0 : index
    %c0_93 = arith.constant 0 : index
    %c0_94 = arith.constant 0 : index
    %139 = vector.load %arg2[%c0_92, %c0_93, %c0_94] : memref<26x8x128xf32, #tpu.memory_space<vmem>>, vector<1x8x128xf32>
    %140 = vector.shape_cast %139 : vector<1x8x128xf32> to vector<8x128xf32>
    %c1 = arith.constant 1 : index
    %c0_95 = arith.constant 0 : index
    %c0_96 = arith.constant 0 : index
    %141 = vector.load %arg2[%c1, %c0_95, %c0_96] : memref<26x8x128xf32, #tpu.memory_space<vmem>>, vector<1x8x128xf32>
    %142 = vector.shape_cast %141 : vector<1x8x128xf32> to vector<8x128xf32>
    %c2 = arith.constant 2 : index
    %c0_97 = arith.constant 0 : index
    %c0_98 = arith.constant 0 : index
    %143 = vector.load %arg2[%c2, %c0_97, %c0_98] : memref<26x8x128xf32, #tpu.memory_space<vmem>>, vector<1x8x128xf32>
    %144 = vector.shape_cast %143 : vector<1x8x128xf32> to vector<8x128xf32>
    %c3 = arith.constant 3 : index
    %c0_99 = arith.constant 0 : index
    %c0_100 = arith.constant 0 : index
    %145 = vector.load %arg2[%c3, %c0_99, %c0_100] : memref<26x8x128xf32, #tpu.memory_space<vmem>>, vector<1x8x128xf32>
    %146 = vector.shape_cast %145 : vector<1x8x128xf32> to vector<8x128xf32>
    %c5 = arith.constant 5 : index
    %c0_101 = arith.constant 0 : index
    %c0_102 = arith.constant 0 : index
    %147 = vector.load %arg2[%c5, %c0_101, %c0_102] : memref<26x8x128xf32, #tpu.memory_space<vmem>>, vector<1x8x128xf32>
    %148 = vector.shape_cast %147 : vector<1x8x128xf32> to vector<8x128xf32>
    %c6 = arith.constant 6 : index
    %c0_103 = arith.constant 0 : index
    %c0_104 = arith.constant 0 : index
    %149 = vector.load %arg2[%c6, %c0_103, %c0_104] : memref<26x8x128xf32, #tpu.memory_space<vmem>>, vector<1x8x128xf32>
    %150 = vector.shape_cast %149 : vector<1x8x128xf32> to vector<8x128xf32>
    %c7 = arith.constant 7 : index
    %c0_105 = arith.constant 0 : index
    %c0_106 = arith.constant 0 : index
    %151 = vector.load %arg2[%c7, %c0_105, %c0_106] : memref<26x8x128xf32, #tpu.memory_space<vmem>>, vector<1x8x128xf32>
    %152 = vector.shape_cast %151 : vector<1x8x128xf32> to vector<8x128xf32>
    %c8 = arith.constant 8 : index
    %c0_107 = arith.constant 0 : index
    %c0_108 = arith.constant 0 : index
    %153 = vector.load %arg2[%c8, %c0_107, %c0_108] : memref<26x8x128xf32, #tpu.memory_space<vmem>>, vector<1x8x128xf32>
    %154 = vector.shape_cast %153 : vector<1x8x128xf32> to vector<8x128xf32>
    %c0_109 = arith.constant 0 : index
    %c0_110 = arith.constant 0 : index
    %c0_111 = arith.constant 0 : index
    %155 = vector.load %arg3[%c0_109, %c0_110, %c0_111] : memref<26x8x128xf32, #tpu.memory_space<vmem>>, vector<1x8x128xf32>
    %156 = vector.shape_cast %155 : vector<1x8x128xf32> to vector<8x128xf32>
    %c1_112 = arith.constant 1 : index
    %c0_113 = arith.constant 0 : index
    %c0_114 = arith.constant 0 : index
    %157 = vector.load %arg3[%c1_112, %c0_113, %c0_114] : memref<26x8x128xf32, #tpu.memory_space<vmem>>, vector<1x8x128xf32>
    %158 = vector.shape_cast %157 : vector<1x8x128xf32> to vector<8x128xf32>
    %c2_115 = arith.constant 2 : index
    %c0_116 = arith.constant 0 : index
    %c0_117 = arith.constant 0 : index
    %159 = vector.load %arg3[%c2_115, %c0_116, %c0_117] : memref<26x8x128xf32, #tpu.memory_space<vmem>>, vector<1x8x128xf32>
    %160 = vector.shape_cast %159 : vector<1x8x128xf32> to vector<8x128xf32>
    %c3_118 = arith.constant 3 : index
    %c0_119 = arith.constant 0 : index
    %c0_120 = arith.constant 0 : index
    %161 = vector.load %arg3[%c3_118, %c0_119, %c0_120] : memref<26x8x128xf32, #tpu.memory_space<vmem>>, vector<1x8x128xf32>
    %162 = vector.shape_cast %161 : vector<1x8x128xf32> to vector<8x128xf32>
    %c5_121 = arith.constant 5 : index
    %c0_122 = arith.constant 0 : index
    %c0_123 = arith.constant 0 : index
    %163 = vector.load %arg3[%c5_121, %c0_122, %c0_123] : memref<26x8x128xf32, #tpu.memory_space<vmem>>, vector<1x8x128xf32>
    %164 = vector.shape_cast %163 : vector<1x8x128xf32> to vector<8x128xf32>
    %c6_124 = arith.constant 6 : index
    %c0_125 = arith.constant 0 : index
    %c0_126 = arith.constant 0 : index
    %165 = vector.load %arg3[%c6_124, %c0_125, %c0_126] : memref<26x8x128xf32, #tpu.memory_space<vmem>>, vector<1x8x128xf32>
    %166 = vector.shape_cast %165 : vector<1x8x128xf32> to vector<8x128xf32>
    %c7_127 = arith.constant 7 : index
    %c0_128 = arith.constant 0 : index
    %c0_129 = arith.constant 0 : index
    %167 = vector.load %arg3[%c7_127, %c0_128, %c0_129] : memref<26x8x128xf32, #tpu.memory_space<vmem>>, vector<1x8x128xf32>
    %168 = vector.shape_cast %167 : vector<1x8x128xf32> to vector<8x128xf32>
    %c8_130 = arith.constant 8 : index
    %c0_131 = arith.constant 0 : index
    %c0_132 = arith.constant 0 : index
    %169 = vector.load %arg3[%c8_130, %c0_131, %c0_132] : memref<26x8x128xf32, #tpu.memory_space<vmem>>, vector<1x8x128xf32>
    %170 = vector.shape_cast %169 : vector<1x8x128xf32> to vector<8x128xf32>
    %cst_133 = arith.constant 5.000000e-01 : f32
    %171 = vector.broadcast %cst_133 : f32 to vector<8x128xf32>
    %172 = arith.mulf %171, %160 : vector<8x128xf32>
    %cst_134 = arith.constant 4.480000e+02 : f32
    %173 = vector.broadcast %cst_134 : f32 to vector<8x128xf32>
    %174 = arith.mulf %172, %173 : vector<8x128xf32>
    %cst_135 = arith.constant 5.000000e-01 : f32
    %175 = vector.broadcast %cst_135 : f32 to vector<8x128xf32>
    %176 = arith.mulf %175, %162 : vector<8x128xf32>
    %cst_136 = arith.constant 4.480000e+02 : f32
    %177 = vector.broadcast %cst_136 : f32 to vector<8x128xf32>
    %178 = arith.mulf %176, %177 : vector<8x128xf32>
    %cst_137 = arith.constant 6.400000e+01 : f32
    %179 = vector.broadcast %cst_137 : f32 to vector<8x128xf32>
    %180 = arith.mulf %156, %179 : vector<8x128xf32>
    %181 = arith.subf %180, %174 : vector<8x128xf32>
    %cst_138 = arith.constant 6.400000e+01 : f32
    %182 = vector.broadcast %cst_138 : f32 to vector<8x128xf32>
    %183 = arith.mulf %156, %182 : vector<8x128xf32>
    %184 = arith.addf %183, %174 : vector<8x128xf32>
    %cst_139 = arith.constant 6.400000e+01 : f32
    %185 = vector.broadcast %cst_139 : f32 to vector<8x128xf32>
    %186 = arith.mulf %158, %185 : vector<8x128xf32>
    %187 = arith.subf %186, %178 : vector<8x128xf32>
    %cst_140 = arith.constant 6.400000e+01 : f32
    %188 = vector.broadcast %cst_140 : f32 to vector<8x128xf32>
    %189 = arith.mulf %158, %188 : vector<8x128xf32>
    %190 = arith.addf %189, %178 : vector<8x128xf32>
    %191 = arith.subf %184, %181 : vector<8x128xf32>
    %192 = arith.subf %190, %187 : vector<8x128xf32>
    %193 = arith.mulf %191, %192 : vector<8x128xf32>
    %cst_141 = arith.constant 5.000000e-01 : f32
    %194 = vector.broadcast %cst_141 : f32 to vector<8x128xf32>
    %195 = arith.mulf %194, %144 : vector<8x128xf32>
    %cst_142 = arith.constant 4.480000e+02 : f32
    %196 = vector.broadcast %cst_142 : f32 to vector<8x128xf32>
    %197 = arith.mulf %195, %196 : vector<8x128xf32>
    %cst_143 = arith.constant 5.000000e-01 : f32
    %198 = vector.broadcast %cst_143 : f32 to vector<8x128xf32>
    %199 = arith.mulf %198, %146 : vector<8x128xf32>
    %cst_144 = arith.constant 4.480000e+02 : f32
    %200 = vector.broadcast %cst_144 : f32 to vector<8x128xf32>
    %201 = arith.mulf %199, %200 : vector<8x128xf32>
    %cst_145 = arith.constant 6.400000e+01 : f32
    %202 = vector.broadcast %cst_145 : f32 to vector<8x128xf32>
    %203 = arith.mulf %140, %202 : vector<8x128xf32>
    %204 = arith.subf %203, %197 : vector<8x128xf32>
    %cst_146 = arith.constant 6.400000e+01 : f32
    %205 = vector.broadcast %cst_146 : f32 to vector<8x128xf32>
    %206 = arith.mulf %140, %205 : vector<8x128xf32>
    %207 = arith.addf %206, %197 : vector<8x128xf32>
    %cst_147 = arith.constant 6.400000e+01 : f32
    %208 = vector.broadcast %cst_147 : f32 to vector<8x128xf32>
    %209 = arith.mulf %142, %208 : vector<8x128xf32>
    %210 = arith.subf %209, %201 : vector<8x128xf32>
    %cst_148 = arith.constant 6.400000e+01 : f32
    %211 = vector.broadcast %cst_148 : f32 to vector<8x128xf32>
    %212 = arith.mulf %142, %211 : vector<8x128xf32>
    %213 = arith.addf %212, %201 : vector<8x128xf32>
    %214 = arith.subf %207, %204 : vector<8x128xf32>
    %215 = arith.subf %213, %210 : vector<8x128xf32>
    %216 = arith.mulf %214, %215 : vector<8x128xf32>
    %217 = arith.maximumf %204, %181 : vector<8x128xf32>
    %218 = arith.minimumf %207, %184 : vector<8x128xf32>
    %219 = arith.maximumf %210, %187 : vector<8x128xf32>
    %220 = arith.minimumf %213, %190 : vector<8x128xf32>
    %221 = arith.subf %218, %217 : vector<8x128xf32>
    %222 = arith.subf %220, %219 : vector<8x128xf32>
    %223 = arith.mulf %221, %222 : vector<8x128xf32>
    %224 = arith.addf %216, %193 : vector<8x128xf32>
    %225 = arith.subf %224, %223 : vector<8x128xf32>
    %cst_149 = arith.constant 0.000000e+00 : f32
    %226 = vector.broadcast %cst_149 : f32 to vector<8x128xf32>
    %227 = arith.cmpf oeq, %225, %226 : vector<8x128xf32>
    %cst_150 = arith.constant 1.000000e+00 : f32
    %228 = vector.broadcast %cst_150 : f32 to vector<8x128xf32>
    %229 = arith.select %227, %228, %225 : vector<8x128xi1>, vector<8x128xf32>
    %230 = arith.cmpf oge, %217, %218 : vector<8x128xf32>
    %231 = arith.cmpf oge, %219, %220 : vector<8x128xf32>
    %232 = arith.ori %230, %231 : vector<8x128xi1>
    %233 = arith.divf %223, %229 : vector<8x128xf32>
    %cst_151 = arith.constant 0.000000e+00 : f32
    %234 = vector.broadcast %cst_151 : f32 to vector<8x128xf32>
    %235 = arith.select %232, %234, %233 : vector<8x128xi1>, vector<8x128xf32>
    %cst_152 = arith.constant 5.000000e-01 : f32
    %236 = vector.broadcast %cst_152 : f32 to vector<8x128xf32>
    %237 = arith.mulf %236, %152 : vector<8x128xf32>
    %cst_153 = arith.constant 4.480000e+02 : f32
    %238 = vector.broadcast %cst_153 : f32 to vector<8x128xf32>
    %239 = arith.mulf %237, %238 : vector<8x128xf32>
    %cst_154 = arith.constant 5.000000e-01 : f32
    %240 = vector.broadcast %cst_154 : f32 to vector<8x128xf32>
    %241 = arith.mulf %240, %154 : vector<8x128xf32>
    %cst_155 = arith.constant 4.480000e+02 : f32
    %242 = vector.broadcast %cst_155 : f32 to vector<8x128xf32>
    %243 = arith.mulf %241, %242 : vector<8x128xf32>
    %cst_156 = arith.constant 6.400000e+01 : f32
    %244 = vector.broadcast %cst_156 : f32 to vector<8x128xf32>
    %245 = arith.mulf %148, %244 : vector<8x128xf32>
    %246 = arith.subf %245, %239 : vector<8x128xf32>
    %cst_157 = arith.constant 6.400000e+01 : f32
    %247 = vector.broadcast %cst_157 : f32 to vector<8x128xf32>
    %248 = arith.mulf %148, %247 : vector<8x128xf32>
    %249 = arith.addf %248, %239 : vector<8x128xf32>
    %cst_158 = arith.constant 6.400000e+01 : f32
    %250 = vector.broadcast %cst_158 : f32 to vector<8x128xf32>
    %251 = arith.mulf %150, %250 : vector<8x128xf32>
    %252 = arith.subf %251, %243 : vector<8x128xf32>
    %cst_159 = arith.constant 6.400000e+01 : f32
    %253 = vector.broadcast %cst_159 : f32 to vector<8x128xf32>
    %254 = arith.mulf %150, %253 : vector<8x128xf32>
    %255 = arith.addf %254, %243 : vector<8x128xf32>
    %256 = arith.subf %249, %246 : vector<8x128xf32>
    %257 = arith.subf %255, %252 : vector<8x128xf32>
    %258 = arith.mulf %256, %257 : vector<8x128xf32>
    %259 = arith.maximumf %246, %181 : vector<8x128xf32>
    %260 = arith.minimumf %249, %184 : vector<8x128xf32>
    %261 = arith.maximumf %252, %187 : vector<8x128xf32>
    %262 = arith.minimumf %255, %190 : vector<8x128xf32>
    %263 = arith.subf %260, %259 : vector<8x128xf32>
    %264 = arith.subf %262, %261 : vector<8x128xf32>
    %265 = arith.mulf %263, %264 : vector<8x128xf32>
    %266 = arith.addf %258, %193 : vector<8x128xf32>
    %267 = arith.subf %266, %265 : vector<8x128xf32>
    %cst_160 = arith.constant 0.000000e+00 : f32
    %268 = vector.broadcast %cst_160 : f32 to vector<8x128xf32>
    %269 = arith.cmpf oeq, %267, %268 : vector<8x128xf32>
    %cst_161 = arith.constant 1.000000e+00 : f32
    %270 = vector.broadcast %cst_161 : f32 to vector<8x128xf32>
    %271 = arith.select %269, %270, %267 : vector<8x128xi1>, vector<8x128xf32>
    %272 = arith.cmpf oge, %259, %260 : vector<8x128xf32>
    %273 = arith.cmpf oge, %261, %262 : vector<8x128xf32>
    %274 = arith.ori %272, %273 : vector<8x128xi1>
    %275 = arith.divf %265, %271 : vector<8x128xf32>
    %cst_162 = arith.constant 0.000000e+00 : f32
    %276 = vector.broadcast %cst_162 : f32 to vector<8x128xf32>
    %277 = arith.select %274, %276, %275 : vector<8x128xi1>, vector<8x128xf32>
    %278 = arith.cmpf ogt, %235, %277 : vector<8x128xf32>
    %279 = arith.select %278, %235, %277 : vector<8x128xi1>, vector<8x128xf32>
    %280 = arith.select %278, %140, %148 : vector<8x128xi1>, vector<8x128xf32>
    %281 = arith.select %278, %142, %150 : vector<8x128xi1>, vector<8x128xf32>
    %282 = arith.select %278, %144, %152 : vector<8x128xi1>, vector<8x128xf32>
    %283 = arith.select %278, %146, %154 : vector<8x128xi1>, vector<8x128xf32>
    %284 = arith.select %278, %14, %16 : vector<8x128xi1>, vector<8x128xf32>
    %285 = arith.select %278, %16, %14 : vector<8x128xi1>, vector<8x128xf32>
    %286 = arith.select %278, %156, %164 : vector<8x128xi1>, vector<8x128xf32>
    %287 = arith.select %278, %158, %166 : vector<8x128xi1>, vector<8x128xf32>
    %288 = arith.select %278, %160, %168 : vector<8x128xi1>, vector<8x128xf32>
    %289 = arith.select %278, %162, %170 : vector<8x128xi1>, vector<8x128xf32>
    %290 = arith.subf %284, %279 : vector<8x128xf32>
    %291 = arith.mulf %290, %290 : vector<8x128xf32>
    %292 = arith.mulf %285, %285 : vector<8x128xf32>
    %cst_163 = arith.constant 1.000000e+00 : f32
    %293 = vector.broadcast %cst_163 : f32 to vector<8x128xf32>
    %294 = arith.select %6, %282, %293 : vector<8x128xi1>, vector<8x128xf32>
    %295 = math.sqrt %294 : vector<8x128xf32>
    %cst_164 = arith.constant 1.000000e+00 : f32
    %296 = vector.broadcast %cst_164 : f32 to vector<8x128xf32>
    %297 = arith.select %6, %283, %296 : vector<8x128xi1>, vector<8x128xf32>
    %298 = math.sqrt %297 : vector<8x128xf32>
    %cst_165 = arith.constant 1.000000e+00 : f32
    %299 = vector.broadcast %cst_165 : f32 to vector<8x128xf32>
    %300 = arith.select %6, %288, %299 : vector<8x128xi1>, vector<8x128xf32>
    %301 = math.sqrt %300 : vector<8x128xf32>
    %cst_166 = arith.constant 1.000000e+00 : f32
    %302 = vector.broadcast %cst_166 : f32 to vector<8x128xf32>
    %303 = arith.select %6, %289, %302 : vector<8x128xi1>, vector<8x128xf32>
    %304 = math.sqrt %303 : vector<8x128xf32>
    %305 = arith.subf %280, %286 : vector<8x128xf32>
    %306 = arith.subf %281, %287 : vector<8x128xf32>
    %307 = arith.subf %295, %301 : vector<8x128xf32>
    %308 = arith.subf %298, %304 : vector<8x128xf32>
    %309 = arith.mulf %305, %305 : vector<8x128xf32>
    %310 = arith.mulf %306, %306 : vector<8x128xf32>
    %311 = arith.addf %309, %310 : vector<8x128xf32>
    %312 = arith.mulf %307, %307 : vector<8x128xf32>
    %313 = arith.addf %311, %312 : vector<8x128xf32>
    %314 = arith.mulf %308, %308 : vector<8x128xf32>
    %315 = arith.addf %313, %314 : vector<8x128xf32>
    %cst_167 = arith.constant 5.000000e-01 : f32
    %316 = vector.broadcast %cst_167 : f32 to vector<8x128xf32>
    %317 = arith.mulf %316, %24 : vector<8x128xf32>
    %318 = arith.addf %317, %138 : vector<8x128xf32>
    %cst_168 = arith.constant 5.000000e-01 : f32
    %319 = vector.broadcast %cst_168 : f32 to vector<8x128xf32>
    %320 = arith.mulf %319, %292 : vector<8x128xf32>
    %321 = arith.addf %291, %320 : vector<8x128xf32>
    %cst_169 = arith.constant 5.000000e+00 : f32
    %322 = vector.broadcast %cst_169 : f32 to vector<8x128xf32>
    %323 = arith.mulf %322, %315 : vector<8x128xf32>
    %324 = arith.addf %321, %323 : vector<8x128xf32>
    %325 = arith.mulf %8, %324 : vector<8x128xf32>
    %326 = arith.addf %318, %325 : vector<8x128xf32>
    %c0_170 = arith.constant 0 : index
    %c0_171 = arith.constant 0 : index
    %327 = vector.load %arg5[%c0_170, %c0_171] : memref<8x128xf32, #tpu.memory_space<vmem>>, vector<8x128xf32>
    %328 = arith.addf %327, %326 : vector<8x128xf32>
    %c0_172 = arith.constant 0 : index
    %c0_173 = arith.constant 0 : index
    %329 = vector.load %arg5[%c0_172, %c0_173] : memref<8x128xf32, #tpu.memory_space<vmem>>, vector<8x128xf32>
    tpu.vector_store %arg5[%c0_172, %c0_173], %328 {strides = array<i32>} : memref<8x128xf32, #tpu.memory_space<vmem>>, vector<8x128xf32>,
    %c0_i32_174 = arith.constant 0 : i32
    %330 = arith.cmpi eq, %arg0, %c0_i32_174 : i32
    %331 = arith.extui %330 : i1 to i32
    %c0_i32_175 = arith.constant 0 : i32
    %332 = arith.cmpi ne, %331, %c0_i32_175 : i32
    scf.if %332 {
      %c0_176 = arith.constant 0 : index
      %333 = memref.load %arg1[%c0_176] : memref<1xi32, #tpu.memory_space<smem>>
      %334 = arith.sitofp %333 : i32 to f32
      %cst_177 = arith.constant 1.000000e+00 : f32
      %335 = arith.divf %cst_177, %334 : f32
      %c0_178 = arith.constant 0 : index
      %c0_179 = arith.constant 0 : index
      %336 = vector.load %arg5[%c0_178, %c0_179] : memref<8x128xf32, #tpu.memory_space<vmem>>, vector<8x128xf32>
      %337 = vector.shape_cast %336 : vector<8x128xf32> to vector<1x8x128xf32>
      %cst_180 = arith.constant dense<0.000000e+00> : vector<1xf32>
      %338 = vector.multi_reduction <add>, %337, %cst_180 [1, 2] : vector<1x8x128xf32> to vector<1xf32>
      %339 = vector.shape_cast %338 : vector<1xf32> to vector<1x1x1xf32>
      %340 = vector.extract %339[0, 0, 0] : f32 from vector<1x1x1xf32>
      %341 = arith.mulf %340, %335 : f32
      %c0_181 = arith.constant 0 : index
      %c0_182 = arith.constant 0 : index
      %342 = memref.load %arg4[%c0_181, %c0_182] : memref<1x1xf32, #tpu.memory_space<smem>>
      memref.store %341, %arg4[%c0_181, %c0_182] : memref<1x1xf32, #tpu.memory_space<smem>>
    } else {
    }
    return
  }
  func.func @transform_0(%arg0: i32, %arg1: memref<1xi32, #tpu.memory_space<smem>>) -> (i32, i32, i32) {
    %c0_i32 = arith.constant 0 : i32
    %c0_i32_0 = arith.constant 0 : i32
    %c0_i32_1 = arith.constant 0 : i32
    return %c0_i32, %arg0, %c0_i32_0 : i32, i32, i32
  }
  func.func @transform_1(%arg0: i32, %arg1: memref<1xi32, #tpu.memory_space<smem>>) -> (i32, i32, i32) {
    %c0_i32 = arith.constant 0 : i32
    %c0_i32_0 = arith.constant 0 : i32
    %c0_i32_1 = arith.constant 0 : i32
    return %c0_i32, %arg0, %c0_i32_0 : i32, i32, i32
  }
  func.func @transform_2(%arg0: i32, %arg1: memref<1xi32, #tpu.memory_space<smem>>) -> (i32, i32) {
    %c0_i32 = arith.constant 0 : i32
    %c0_i32_0 = arith.constant 0 : i32
    %c0_i32_1 = arith.constant 0 : i32
    return %c0_i32, %c0_i32_0 : i32, i32
  }
}

</mosaic_0001>

<llo_original>
// kernel: tpu_custom_call.1
$region0: #{tpu_custom_call.1}
  #allocation0 [shape = 'u32[]', space=smem, size = 0x4, offset = 0x4, fixed_abs, tag = 'smem constant byte address 0x4 - core index']
  #allocation1 [shape = 'u32[144,128]{1,0:T(1,128)}', space=vmem, size = 0x12000, scoped, tag = 'internal scratch']
  #allocation2 [shape = 'f32[8,128]{1,0:T(8,128)}', space=vmem, size = 0x1000, scoped, tag = 'scratch operand']
  #allocation3 [shape = 's32[1]{0}', space=sflag, size = 0x4, scoped, tag = 'scoped memory for tpu_custom_call.1']
  #allocation4 [shape = 's32[1]{0:T(128)S(6)}', space=smem, size = 0x200, scoped, tag = 'prefetched SMEM operand 0']
  %s0 = inlined_call_operand.<no memory space> [shape: s32[1], index: 0, kind: input, shape index: {}]
  %s1 = inlined_call_operand.hbm [shape: f32[26,8,128], index: 1, kind: input, shape index: {}]
  %s2 = inlined_call_operand.hbm [shape: f32[26,8,128], index: 2, kind: input, shape index: {}]
  %s3 = inlined_call_operand.hbm [shape: f32[1,1], index: 3, kind: output, shape index: {}]
  %s4 = sld [smem:[#allocation0]]
  $region34: #{tpu_custom_call.1} parent=0
    _
  %s6 = ssub.s32 1, %s4
  %s7 = scalar_select 0, %s6, %s4
  %8 = sst [smem:[#allocation4]] %s0
  $region1: #{tpu_custom_call.1} parent=0
    #allocation5 [shape = 'u8[106496]{0}', space=vmem, size = 0x1a000, scoped, tag = 'input window, operand 1, single buffered']
    #allocation6 [shape = 's32[1]{0}', space=sflag, size = 0x4, scoped, tag = 'scoped memory for tpu_custom_call.1']
    #allocation7 [shape = 's32[1]{0}', space=sflag, size = 0x4, scoped, tag = 'scoped memory for tpu_custom_call.1']
    #allocation8 [shape = 'u8[106496]{0}', space=vmem, size = 0x1a000, scoped, tag = 'input window, operand 2, single buffered']
    #allocation9 [shape = 's32[1]{0}', space=sflag, size = 0x4, scoped, tag = 'scoped memory for tpu_custom_call.1']
    #allocation10 [shape = 'u8[512]{0}', space=smem, size = 0x200, scoped, tag = 'output window, operand 0, single buffered']
    %9 = vsyncpa [#allocation6], 0
    %10 = vsyncpa [#allocation9], 0
    %11 = vsyncpa [#allocation7], 0
    // Predicated region
    $region2: #{tpu_custom_call.1} parent=1 // pred_check
      _
    $region3: #{tpu_custom_call.1} parent=1 // pred_check_branch
      %13 = sbr.rel (0) target = $region5
    $region4: #{tpu_custom_call.1} parent=1 // pred_region
      %s15 = ssub.s32 3328, 3328
      %16 = vsyncadd [#allocation6], %s15
      %s17 = sshll.u32 [#allocation5], 4
      %s18 = int_to_ptr.vmem [resolvable:$true] %s17
      %23 = dma.hbm_to_vmem [thread:$0]  %s1, 3328, %s18, [#allocation6], 128, 128, 8
    $region5: #{tpu_custom_call.1} parent=1 // pred_fallthru
      _
    // Predicated region
    $region6: #{tpu_custom_call.1} parent=1 // pred_check
      _
    $region7: #{tpu_custom_call.1} parent=1 // pred_check_branch
      %25 = sbr.rel (0) target = $region9
    $region8: #{tpu_custom_call.1} parent=1 // pred_region
      %s27 = ssub.s32 3328, 3328
      %28 = vsyncadd [#allocation9], %s27
      %s29 = sshll.u32 [#allocation8], 4
      %s30 = int_to_ptr.vmem [resolvable:$true] %s29
      %35 = dma.hbm_to_vmem [thread:$0]  %s2, 3328, %s30, [#allocation9], 128, 128, 8
    $region9: #{tpu_custom_call.1} parent=1 // pred_fallthru
      _
    // Predicated region
    $region10: #{tpu_custom_call.1} parent=1 // pred_check
      _
    $region11: #{tpu_custom_call.1} parent=1 // pred_check_branch
      %37 = sbr.rel (0) target = $region13
    $region12: #{tpu_custom_call.1} parent=1 // pred_region
      %38 = dma.done [#allocation6], 3328
    $region13: #{tpu_custom_call.1} parent=1 // pred_fallthru
      _
    // Predicated region
    $region14: #{tpu_custom_call.1} parent=1 // pred_check
      _
    $region15: #{tpu_custom_call.1} parent=1 // pred_check_branch
      %40 = sbr.rel (0) target = $region17
    $region16: #{tpu_custom_call.1} parent=1 // pred_region
      %41 = dma.done [#allocation9], 3328
    $region17: #{tpu_custom_call.1} parent=1 // pred_fallthru
      _
    %p42 = scmp.eq.s32.totalorder 0, 0
    // Predicated region
    $region18: #{tpu_custom_call.1} parent=1 // pred_check
      %p43 = pneg %p42
    $region19: #{tpu_custom_call.1} parent=1 // pred_check_branch
      %45 = sbr.rel (%p43) target = $region21
    $region20: #{tpu_custom_call.1} parent=1 // pred_region
      %46 = vst [vmem:[#allocation2] sm:$0xff] 0.0
    $region21: #{tpu_custom_call.1} parent=1 // pred_fallthru
      _
    %s47 = scalar_lea.vmem [#allocation8], 32
    %v48 = vld [vmem:[%s47] sm:$0xff]
    %vm49 = vcmp.gt.f32.partialorder %v48, 0.0
    %v50 = vsel %vm49, 1, 0
    %v51 = vcvt.s32.f32 %v50
    %vm52 = vcmp.eq.f32.partialorder %v48, 0.0
    %v53 = vsel %vm52, 1, 0
    %v54 = vcvt.s32.f32 %v53
    %s55 = scalar_lea.vmem [#allocation5], 32
    %v56 = vld [vmem:[%s55] sm:$0xff]
    %s57 = scalar_lea.vmem [#allocation5], 72
    %v58 = vld [vmem:[%s57] sm:$0xff]
    %s59 = scalar_lea.vmem [#allocation8], 72
    %v60 = vld [vmem:[%s59] sm:$0xff]
    %v61 = vsub.f32 %v56, %v48
    %v62 = vsub.f32 %v58, %v60
    %v63 = vmul.f32 %v61, %v61
    %v64 = vmul.f32 %v62, %v62
    %v65 = vadd.f32 %v63, %v64
    %v66 = vmul.f32 %v54, %v65
    %s67 = scalar_lea.vmem [#allocation5], 80
    %v68 = vld [vmem:[%s67] sm:$0xff]
    %s69 = scalar_lea.vmem [#allocation8], 80
    %v70 = vld [vmem:[%s69] sm:$0xff]
    %v71 = vsub.f32 %v68, %v70
    %v72 = vmul.f32 %v71, %v71
    %v73 = vadd.f32 %v72, 0.0
    %s74 = scalar_lea.vmem [#allocation5], 88
    %v75 = vld [vmem:[%s74] sm:$0xff]
    %s76 = scalar_lea.vmem [#allocation8], 88
    %v77 = vld [vmem:[%s76] sm:$0xff]
    %v78 = vsub.f32 %v75, %v77
    %v79 = vmul.f32 %v78, %v78
    %v80 = vadd.f32 %v73, %v79
    %s81 = scalar_lea.vmem [#allocation5], 96
    %v82 = vld [vmem:[%s81] sm:$0xff]
    %s83 = scalar_lea.vmem [#allocation8], 96
    %v84 = vld [vmem:[%s83] sm:$0xff]
    %v85 = vsub.f32 %v82, %v84
    %v86 = vmul.f32 %v85, %v85
    %v87 = vadd.f32 %v80, %v86
    %s88 = scalar_lea.vmem [#allocation5], 104
    %v89 = vld [vmem:[%s88] sm:$0xff]
    %s90 = scalar_lea.vmem [#allocation8], 104
    %v91 = vld [vmem:[%s90] sm:$0xff]
    %v92 = vsub.f32 %v89, %v91
    %v93 = vmul.f32 %v92, %v92
    %v94 = vadd.f32 %v87, %v93
    %s95 = scalar_lea.vmem [#allocation5], 112
    %v96 = vld [vmem:[%s95] sm:$0xff]
    %s97 = scalar_lea.vmem [#allocation8], 112
    %v98 = vld [vmem:[%s97] sm:$0xff]
    %v99 = vsub.f32 %v96, %v98
    %v100 = vmul.f32 %v99, %v99
    %v101 = vadd.f32 %v94, %v100
    %s102 = scalar_lea.vmem [#allocation5], 120
    %v103 = vld [vmem:[%s102] sm:$0xff]
    %s104 = scalar_lea.vmem [#allocation8], 120
    %v105 = vld [vmem:[%s104] sm:$0xff]
    %v106 = vsub.f32 %v103, %v105
    %v107 = vmul.f32 %v106, %v106
    %v108 = vadd.f32 %v101, %v107
    %s109 = scalar_lea.vmem [#allocation5], 128
    %v110 = vld [vmem:[%s109] sm:$0xff]
    %s111 = scalar_lea.vmem [#allocation8], 128
    %v112 = vld [vmem:[%s111] sm:$0xff]
    %v113 = vsub.f32 %v110, %v112
    %v114 = vmul.f32 %v113, %v113
    %v115 = vadd.f32 %v108, %v114
    %s116 = scalar_lea.vmem [#allocation5], 136
    %v117 = vld [vmem:[%s116] sm:$0xff]
    %s118 = scalar_lea.vmem [#allocation8], 136
    %v119 = vld [vmem:[%s118] sm:$0xff]
    %v120 = vsub.f32 %v117, %v119
    %v121 = vmul.f32 %v120, %v120
    %v122 = vadd.f32 %v115, %v121
    %s123 = scalar_lea.vmem [#allocation5], 144
    %v124 = vld [vmem:[%s123] sm:$0xff]
    %s125 = scalar_lea.vmem [#allocation8], 144
    %v126 = vld [vmem:[%s125] sm:$0xff]
    %v127 = vsub.f32 %v124, %v126
    %v128 = vmul.f32 %v127, %v127
    %v129 = vadd.f32 %v122, %v128
    %s130 = scalar_lea.vmem [#allocation5], 152
    %v131 = vld [vmem:[%s130] sm:$0xff]
    %s132 = scalar_lea.vmem [#allocation8], 152
    %v133 = vld [vmem:[%s132] sm:$0xff]
    %v134 = vsub.f32 %v131, %v133
    %v135 = vmul.f32 %v134, %v134
    %v136 = vadd.f32 %v129, %v135
    %s137 = scalar_lea.vmem [#allocation5], 160
    %v138 = vld [vmem:[%s137] sm:$0xff]
    %s139 = scalar_lea.vmem [#allocation8], 160
    %v140 = vld [vmem:[%s139] sm:$0xff]
    %v141 = vsub.f32 %v138, %v140
    %v142 = vmul.f32 %v141, %v141
    %v143 = vadd.f32 %v136, %v142
    %s144 = scalar_lea.vmem [#allocation5], 168
    %v145 = vld [vmem:[%s144] sm:$0xff]
    %s146 = scalar_lea.vmem [#allocation8], 168
    %v147 = vld [vmem:[%s146] sm:$0xff]
    %v148 = vsub.f32 %v145, %v147
    %v149 = vmul.f32 %v148, %v148
    %v150 = vadd.f32 %v143, %v149
    %s151 = scalar_lea.vmem [#allocation5], 176
    %v152 = vld [vmem:[%s151] sm:$0xff]
    %s153 = scalar_lea.vmem [#allocation8], 176
    %v154 = vld [vmem:[%s153] sm:$0xff]
    %v155 = vsub.f32 %v152, %v154
    %v156 = vmul.f32 %v155, %v155
    %v157 = vadd.f32 %v150, %v156
    %s158 = scalar_lea.vmem [#allocation5], 184
    %v159 = vld [vmem:[%s158] sm:$0xff]
    %s160 = scalar_lea.vmem [#allocation8], 184
    %v161 = vld [vmem:[%s160] sm:$0xff]
    %v162 = vsub.f32 %v159, %v161
    %v163 = vmul.f32 %v162, %v162
    %v164 = vadd.f32 %v157, %v163
    %s165 = scalar_lea.vmem [#allocation5], 192
    %v166 = vld [vmem:[%s165] sm:$0xff]
    %s167 = scalar_lea.vmem [#allocation8], 192
    %v168 = vld [vmem:[%s167] sm:$0xff]
    %v169 = vsub.f32 %v166, %v168
    %v170 = vmul.f32 %v169, %v169
    %v171 = vadd.f32 %v164, %v170
    %s172 = scalar_lea.vmem [#allocation5], 200
    %v173 = vld [vmem:[%s172] sm:$0xff]
    %s174 = scalar_lea.vmem [#allocation8], 200
    %v175 = vld [vmem:[%s174] sm:$0xff]
    %v176 = vsub.f32 %v173, %v175
    %v177 = vmul.f32 %v176, %v176
    %v178 = vadd.f32 %v171, %v177
    %v179 = vmul.f32 %v51, %v178
    %v180 = vld [vmem:[#allocation5] sm:$0xff]
    %s181 = scalar_lea.vmem [#allocation5], 8
    %v182 = vld [vmem:[%s181] sm:$0xff]
    %s183 = scalar_lea.vmem [#allocation5], 16
    %v184 = vld [vmem:[%s183] sm:$0xff]
    %s185 = scalar_lea.vmem [#allocation5], 24
    %v186 = vld [vmem:[%s185] sm:$0xff]
    %s187 = scalar_lea.vmem [#allocation5], 40
    %v188 = vld [vmem:[%s187] sm:$0xff]
    %s189 = scalar_lea.vmem [#allocation5], 48
    %v190 = vld [vmem:[%s189] sm:$0xff]
    %s191 = scalar_lea.vmem [#allocation5], 56
    %v192 = vld [vmem:[%s191] sm:$0xff]
    %s193 = scalar_lea.vmem [#allocation5], 64
    %v194 = vld [vmem:[%s193] sm:$0xff]
    %v195 = vld [vmem:[#allocation8] sm:$0xff]
    %s196 = scalar_lea.vmem [#allocation8], 8
    %v197 = vld [vmem:[%s196] sm:$0xff]
    %s198 = scalar_lea.vmem [#allocation8], 16
    %v199 = vld [vmem:[%s198] sm:$0xff]
    %s200 = scalar_lea.vmem [#allocation8], 24
    %v201 = vld [vmem:[%s200] sm:$0xff]
    %s202 = scalar_lea.vmem [#allocation8], 40
    %v203 = vld [vmem:[%s202] sm:$0xff]
    %s204 = scalar_lea.vmem [#allocation8], 48
    %v205 = vld [vmem:[%s204] sm:$0xff]
    %s206 = scalar_lea.vmem [#allocation8], 56
    %v207 = vld [vmem:[%s206] sm:$0xff]
    %s208 = scalar_lea.vmem [#allocation8], 64
    %v209 = vld [vmem:[%s208] sm:$0xff]
    %v210 = vmul.f32 %v199, 0.5
    %v211 = vmul.f32 %v210, 448.0
    %v212 = vmul.f32 %v201, 0.5
    %v213 = vmul.f32 %v212, 448.0
    %v214 = vmul.f32 %v195, 64.0
    %v215 = vsub.f32 %v214, %v211
    %v216 = vadd.f32 %v214, %v211
    %v217 = vmul.f32 %v197, 64.0
    %v218 = vsub.f32 %v217, %v213
    %v219 = vadd.f32 %v217, %v213
    %v220 = vsub.f32 %v216, %v215
    %v221 = vsub.f32 %v219, %v218
    %v222 = vmul.f32 %v220, %v221
    %v223 = vmul.f32 %v184, 0.5
    %v224 = vmul.f32 %v223, 448.0
    %v225 = vmul.f32 %v186, 0.5
    %v226 = vmul.f32 %v225, 448.0
    %v227 = vmul.f32 %v180, 64.0
    %v228 = vsub.f32 %v227, %v224
    %v229 = vadd.f32 %v227, %v224
    %v230 = vmul.f32 %v182, 64.0
    %v231 = vsub.f32 %v230, %v226
    %v232 = vadd.f32 %v230, %v226
    %v233 = vsub.f32 %v229, %v228
    %v234 = vsub.f32 %v232, %v231
    %v235 = vmul.f32 %v233, %v234
    %v236 = vmax.f32 %v228, %v215
    %v237 = vmin.f32 %v229, %v216
    %v238 = vmax.f32 %v231, %v218
    %v239 = vmin.f32 %v232, %v219
    %v240 = vsub.f32 %v237, %v236
    %v241 = vsub.f32 %v239, %v238
    %v242 = vmul.f32 %v240, %v241
    %v243 = vadd.f32 %v235, %v222
    %v244 = vsub.f32 %v243, %v242
    %vm245 = vcmp.eq.f32.partialorder %v244, 0.0
    %v246 = vsel %vm245, 1.0, %v244
    %vm247 = vcmp.ge.f32.partialorder %v236, %v237
    %vm248 = vcmp.ge.f32.partialorder %v238, %v239
    %vm249 = vmor %vm247, %vm248
    %v250 = vrcp.pop %v246
    %v251 = vmul.f32 %v242, %v250
    %v252 = vsel %vm249, 0.0, %v251
    %v253 = vmul.f32 %v192, 0.5
    %v254 = vmul.f32 %v253, 448.0
    %v255 = vmul.f32 %v194, 0.5
    %v256 = vmul.f32 %v255, 448.0
    %v257 = vmul.f32 %v188, 64.0
    %v258 = vsub.f32 %v257, %v254
    %v259 = vadd.f32 %v257, %v254
    %v260 = vmul.f32 %v190, 64.0
    %v261 = vsub.f32 %v260, %v256
    %v262 = vadd.f32 %v260, %v256
    %v263 = vsub.f32 %v259, %v258
    %v264 = vsub.f32 %v262, %v261
    %v265 = vmul.f32 %v263, %v264
    %v266 = vmax.f32 %v258, %v215
    %v267 = vmin.f32 %v259, %v216
    %v268 = vmax.f32 %v261, %v218
    %v269 = vmin.f32 %v262, %v219
    %v270 = vsub.f32 %v267, %v266
    %v271 = vsub.f32 %v269, %v268
    %v272 = vmul.f32 %v270, %v271
    %v273 = vadd.f32 %v265, %v222
    %v274 = vsub.f32 %v273, %v272
    %vm275 = vcmp.eq.f32.partialorder %v274, 0.0
    %v276 = vsel %vm275, 1.0, %v274
    %vm277 = vcmp.ge.f32.partialorder %v266, %v267
    %vm278 = vcmp.ge.f32.partialorder %v268, %v269
    %vm279 = vmor %vm277, %vm278
    %v280 = vrcp.pop %v276
    %v281 = vmul.f32 %v272, %v280
    %v282 = vsel %vm279, 0.0, %v281
    %vm283 = vcmp.gt.f32.partialorder %v252, %v282
    %v284 = vsel %vm283, %v252, %v282
    %v285 = vsel %vm283, %v180, %v188
    %v286 = vsel %vm283, %v182, %v190
    %v287 = vsel %vm283, %v184, %v192
    %v288 = vsel %vm283, %v186, %v194
    %v289 = vsel %vm283, %v56, %v58
    %v290 = vsel %vm283, %v58, %v56
    %v291 = vsel %vm283, %v195, %v203
    %v292 = vsel %vm283, %v197, %v205
    %v293 = vsel %vm283, %v199, %v207
    %v294 = vsel %vm283, %v201, %v209
    %v295 = vsub.f32 %v289, %v284
    %v296 = vmul.f32 %v295, %v295
    %v297 = vmul.f32 %v290, %v290
    %v298 = vsel %vm49, %v287, 1.0
    %v299 = vrsqrt.pop %v298
    %v300 = vmul.f32 %v298, %v299
    %vm301 = vcmp.eq.f32.partialorder %v298, inf
    %v302 = vsel %vm301, %v298, %v300
    %vm303 = vcmp.eq.f32.partialorder %v298, 0.0
    %v304 = vand.u32 %v298, 2147483648
    %v305 = vsel %vm303, %v304, %v302
    %v306 = vsel %vm49, %v288, 1.0
    %v307 = vrsqrt.pop %v306
    %v308 = vmul.f32 %v306, %v307
    %vm309 = vcmp.eq.f32.partialorder %v306, inf
    %v310 = vsel %vm309, %v306, %v308
    %vm311 = vcmp.eq.f32.partialorder %v306, 0.0
    %v312 = vand.u32 %v306, 2147483648
    %v313 = vsel %vm311, %v312, %v310
    %v314 = vsel %vm49, %v293, 1.0
    %v315 = vrsqrt.pop %v314
    %v316 = vmul.f32 %v314, %v315
    %vm317 = vcmp.eq.f32.partialorder %v314, inf
    %v318 = vsel %vm317, %v314, %v316
    %vm319 = vcmp.eq.f32.partialorder %v314, 0.0
    %v320 = vand.u32 %v314, 2147483648
    %v321 = vsel %vm319, %v320, %v318
    %v322 = vsel %vm49, %v294, 1.0
    %v323 = vrsqrt.pop %v322
    %v324 = vmul.f32 %v322, %v323
    %vm325 = vcmp.eq.f32.partialorder %v322, inf
    %v326 = vsel %vm325, %v322, %v324
    %vm327 = vcmp.eq.f32.partialorder %v322, 0.0
    %v328 = vand.u32 %v322, 2147483648
    %v329 = vsel %vm327, %v328, %v326
    %v330 = vsub.f32 %v285, %v291
    %v331 = vsub.f32 %v286, %v292
    %v332 = vsub.f32 %v305, %v321
    %v333 = vsub.f32 %v313, %v329
    %v334 = vmul.f32 %v330, %v330
    %v335 = vmul.f32 %v331, %v331
    %v336 = vadd.f32 %v334, %v335
    %v337 = vmul.f32 %v332, %v332
    %v338 = vadd.f32 %v336, %v337
    %v339 = vmul.f32 %v333, %v333
    %v340 = vadd.f32 %v338, %v339
    %v341 = vmul.f32 %v66, 0.5
    %v342 = vadd.f32 %v341, %v179
    %v343 = vmul.f32 %v297, 0.5
    %v344 = vadd.f32 %v296, %v343
    %v345 = vmul.f32 %v340, 5.0
    %v346 = vadd.f32 %v344, %v345
    %v347 = vmul.f32 %v51, %v346
    %v348 = vadd.f32 %v342, %v347
    %v349 = vld [vmem:[#allocation2] sm:$0xff]
    %v350 = vadd.f32 %v349, %v348
    %351 = vst [vmem:[#allocation2] sm:$0xff] %v350
    // Predicated region
    $region22: #{tpu_custom_call.1} parent=1 // pred_check
      %p352 = pneg %p42
    $region23: #{tpu_custom_call.1} parent=1 // pred_check_branch
      %354 = sbr.rel (%p352) target = $region25
    $region24: #{tpu_custom_call.1} parent=1 // pred_region
      %s355 = sld [smem:[#allocation4]]
      %s356 = scvt.s32.f32 %s355
      %v357 = vstv %s356
      %v358 = vrcp.pop %v357
      %s359 = vtos %v358
      %v360 = vld [vmem:[#allocation2] sm:$0xff]
      %361 = vadd.xlane.f32.xlu0 %v360
      %v362 = vpop.xlane.xlu0 %361
      %v363 = vrot.slane %v362, 4
      %v364 = vadd.f32 %v362, %v363
      %v365 = vrot.slane %v364, 2
      %v366 = vadd.f32 %v364, %v365
      %v367 = vrot.slane %v366, 1
      %v368 = vadd.f32 %v366, %v367
      %s369 = vtos %v368
      %s370 = smul.f32 %s369, %s359
      %s371 = scalar_lea.smem [#allocation10], 0
      %372 = sst [smem:[%s371]] %s370
    $region25: #{tpu_custom_call.1} parent=1 // pred_fallthru
      _
    // Predicated region
    $region26: #{tpu_custom_call.1} parent=1 // pred_check
      _
    $region27: #{tpu_custom_call.1} parent=1 // pred_check_branch
      %374 = sbr.rel (0) target = $region29
    $region28: #{tpu_custom_call.1} parent=1 // pred_region
      %s376 = ssub.s32 16, 16
      %377 = vsyncadd [#allocation7], %s376
      %380 = dma.smem_to_hbm [#allocation10], 16, %s3, [#allocation7]
    $region29: #{tpu_custom_call.1} parent=1 // pred_fallthru
      _
    // Predicated region
    $region30: #{tpu_custom_call.1} parent=1 // pred_check
      _
    $region31: #{tpu_custom_call.1} parent=1 // pred_check_branch
      %382 = sbr.rel (0) target = $region33
    $region32: #{tpu_custom_call.1} parent=1 // pred_region
      %383 = dma.done [#allocation7], 16
    $region33: #{tpu_custom_call.1} parent=1 // pred_fallthru
      _
    %384 = sfence
    %385 = vsyncpa [#allocation6], 1
    %386 = vsyncpa [#allocation9], 1
    %387 = vsyncpa [#allocation7], 1

</llo_original>
